<compile_context>
chip_gen: v6e
topology: v6e:2x2x1
jax: 0.10.0
libtpu: 0.0.40
codegen_flags: <defaults>
</compile_context>

<pallas_src>
import jax
import jax.numpy as jnp
import numpy as np
from jax.experimental import pallas as pl
from jax.experimental.pallas import tpu as pltpu


def _round_up(v: int, m: int) -> int:
    return (v + m - 1) // m * m


def _pos_enc_kernel(pe_ref, x_ref, o_ref):
    """pe_ref: (1, L) VMEM-resident; x_ref: (tb, C*L); o_ref: (tb, C*L + L)."""
    cw = x_ref.shape[1]
    tb = o_ref.shape[0]
    L = pe_ref.shape[1]
    # Bulk, lane-dense copy of the flattened input channels.
    o_ref[:, :cw] = x_ref[...]
    # Append the (already dtype-cast) positional row, broadcast over the batch tile.
    o_ref[:, cw:] = jnp.broadcast_to(pe_ref[...], (tb, L))


def _vmem_budget() -> tuple[int, int]:
    """(tiling budget, vmem_limit_bytes) for the current TPU generation."""
    try:
        cap = int(pltpu.get_tpu_info().vmem_capacity_bytes)
    except Exception:
        cap = 64 << 20  # conservative fallback (= v7x physical VMEM)
    budget = cap // 2                                   # blocks incl. double buffers
    limit = min(cap * 3 // 4, max(budget + (8 << 20), 32 << 20))
    return budget, limit


def _choose_batch_tile(B: int, in_w: int, out_w: int, itemsize: int, budget: int) -> int:
    """Rows per grid step, sized from the (8,128)-padded double-buffered footprint."""
    in_wp = _round_up(in_w, 128)
    out_wp = _round_up(out_w, 128)
    per_8_rows = 2 * itemsize * 8 * (in_wp + out_wp)    # 2x = double buffering
    tb = max(1, budget // per_8_rows) * 8               # multiple of 8 -> legal block
    if tb >= B:
        tb = B                                          # full-extent block is always legal
    # Once B is large enough, keep >= ~4 pipelined steps so DMA-in / copy / DMA-out
    # overlap, and the 'parallel' grid axis can shard across v7x's two TensorCores.
    if B >= 32:
        tb = max(8, min(tb, _round_up(pl.cdiv(B, 4), 8)))
    return tb


def positional_encoding(x: jax.Array, *, max_length: int = 100) -> jax.Array:
    """x: (..., C, L) -> (..., C+1, L), appending the linear positional row."""
    assert x.ndim >= 2, "input must have at least 2 dims (..., C, L)"
    *lead, C, L = x.shape
    assert L <= max_length, "sequence length exceeds max_length"
    B = int(np.prod(lead, dtype=np.int64)) if lead else 1

    # torch.cat promotes against the float32 positional buffer.
    out_dtype = jnp.promote_types(x.dtype, jnp.float32)
    itemsize = jnp.dtype(out_dtype).itemsize

    # Hoisted out of the kernel; linspace(0,1,1) -> [0.0] matches torch exactly.
    pe = jnp.linspace(0.0, 1.0, max_length, dtype=jnp.float32)[:L]
    pe = pe.astype(out_dtype).reshape(1, L)

    in_w = C * L
    out_w = (C + 1) * L
    x2d = x.astype(out_dtype).reshape(B, in_w)          # contiguous reshape: free

    budget, vmem_limit = _vmem_budget()
    tb = _choose_batch_tile(B, in_w, out_w, itemsize, budget)
    grid = (pl.cdiv(B, tb),)

    bytes_accessed = (B * in_w + L + B * out_w) * itemsize

    out2d = pl.pallas_call(
        _pos_enc_kernel,
        out_shape=jax.ShapeDtypeStruct((B, out_w), out_dtype),
        grid_spec=pltpu.PrefetchScalarGridSpec(
            num_scalar_prefetch=0,
            grid=grid,
            in_specs=[
                # Constant block index -> DMA'd once, stays resident in VMEM.
                pl.BlockSpec((1, L), lambda b: (0, 0)),
                # Lane-dense multi-row block per grid step (biggest lever for a
                # mem-bound copy: wide unmasked stores + contiguous HBM DMA).
                pl.BlockSpec((tb, in_w), lambda b: (b, 0)),
            ],
            out_specs=pl.BlockSpec((tb, out_w), lambda b: (b, 0)),
        ),
        compiler_params=pltpu.CompilerParams(
            dimension_semantics=("parallel",),
            vmem_limit_bytes=vmem_limit,
        ),
        cost_estimate=pl.CostEstimate(
            flops=0, transcendentals=0, bytes_accessed=bytes_accessed
        ),
    )(pe, x2d)

    return out2d.reshape(*lead, C + 1, L)


def positional_encoding_ref(x: jax.Array, *, max_length: int = 100) -> jax.Array:
    """Pure-JAX reference mirroring the PyTorch forward."""
    *lead, C, L = x.shape
    out_dtype = jnp.promote_types(x.dtype, jnp.float32)
    pe = jnp.linspace(0.0, 1.0, max_length, dtype=jnp.float32)[None, :]   # (1, max_length)
    p = pe[:, :L]                                                         # (1, L)
    p = jnp.broadcast_to(p, tuple(lead) + (1, L)).astype(out_dtype)       # (..., 1, L)
    return jnp.concatenate((x.astype(out_dtype), p), axis=-2)             # (..., C+1, L)


if __name__ == "__main__":
    key = jax.random.PRNGKey(0)
    k1, k2 = jax.random.split(key)

    # Primary case implied by the module's forward: (batch=2, channels=4, length=16).
    x = jax.random.normal(k1, (2, 4, 16), dtype=jnp.float32)
    out = jax.block_until_ready(positional_encoding(x, max_length=100))
    ref = positional_encoding_ref(x, max_length=100)
    np.testing.assert_allclose(np.asarray(out), np.asarray(ref), rtol=1e-6, atol=1e-6)

    # Extra leading dims, matching the module's expand over input.shape[:-2].
    x4 = jax.random.normal(k2, (2, 3, 5, 16), dtype=jnp.float32)
    out4 = jax.block_until_ready(positional_encoding(x4, max_length=100))
    ref4 = positional_encoding_ref(x4, max_length=100)
    np.testing.assert_allclose(np.asarray(out4), np.asarray(ref4), rtol=1e-6, atol=1e-6)

    print("KERNEL_OK")
</pallas_src>

<mosaic_0001>
module attributes {stable_mosaic.version = 11 : i64} {
  func.func @_pos_enc_kernel(%arg0: i32, %arg1: memref<1x16xf32, #tpu.memory_space<vmem>>, %arg2: memref<2x64xf32, #tpu.memory_space<vmem>>, %arg3: memref<2x80xf32, #tpu.memory_space<vmem>>) attributes {dimension_semantics = [#tpu.dimension_semantics<parallel>], iteration_bounds = array<i64: 1>, scalar_prefetch = 0 : i64, scratch_operands = 0 : i64, tpu.core_type = #tpu.core_type<tc>, window_params = [{pipeline_mode = #tpu.pipeline_mode<synchronous>, transform_indices = @transform_0, window_bounds = array<i64: 1, 16>}, {transform_indices = @transform_1, window_bounds = array<i64: 2, 64>}, {transform_indices = @transform_2, window_bounds = array<i64: 2, 80>}]} {
    %c0 = arith.constant 0 : index
    %c0_0 = arith.constant 0 : index
    %0 = vector.load %arg2[%c0, %c0_0] : memref<2x64xf32, #tpu.memory_space<vmem>>, vector<2x64xf32>
    %c0_1 = arith.constant 0 : index
    %c0_2 = arith.constant 0 : index
    %1 = vector.load %arg3[%c0_1, %c0_2] : memref<2x80xf32, #tpu.memory_space<vmem>>, vector<2x64xf32>
    tpu.vector_store %arg3[%c0_1, %c0_2], %0 {strides = array<i32>} : memref<2x80xf32, #tpu.memory_space<vmem>>, vector<2x64xf32>,
    %c0_3 = arith.constant 0 : index
    %c0_4 = arith.constant 0 : index
    %2 = vector.load %arg1[%c0_3, %c0_4] : memref<1x16xf32, #tpu.memory_space<vmem>>, vector<1x16xf32>
    %3 = vector.shape_cast %2 : vector<1x16xf32> to vector<1x16xf32>
    %4 = vector.broadcast %3 : vector<1x16xf32> to vector<2x16xf32>
    %c0_5 = arith.constant 0 : index
    %c64 = arith.constant 64 : index
    %5 = vector.load %arg3[%c0_5, %c64] : memref<2x80xf32, #tpu.memory_space<vmem>>, vector<2x16xf32>
    tpu.vector_store %arg3[%c0_5, %c64], %4 {strides = array<i32>} : memref<2x80xf32, #tpu.memory_space<vmem>>, vector<2x16xf32>,
    return
  }
  func.func @transform_0(%arg0: i32) -> (i32, i32) {
    %c0_i32 = arith.constant 0 : i32
    %c0_i32_0 = arith.constant 0 : i32
    %c0_i32_1 = arith.constant 0 : i32
    return %c0_i32, %c0_i32_0 : i32, i32
  }
  func.func @transform_1(%arg0: i32) -> (i32, i32) {
    %c0_i32 = arith.constant 0 : i32
    %c0_i32_0 = arith.constant 0 : i32
    return %arg0, %c0_i32 : i32, i32
  }
  func.func @transform_2(%arg0: i32) -> (i32, i32) {
    %c0_i32 = arith.constant 0 : i32
    %c0_i32_0 = arith.constant 0 : i32
    return %arg0, %c0_i32 : i32, i32
  }
}

</mosaic_0001>

<llo_original>
// kernel: tpu_custom_call.1
$region0: #{tpu_custom_call.1}
  #allocation0 [shape = 'u32[]', space=smem, size = 0x4, offset = 0x4, fixed_abs, tag = 'smem constant byte address 0x4 - core index']
  #allocation1 [shape = 'u32[144,128]{1,0:T(1,128)}', space=vmem, size = 0x12000, scoped, tag = 'internal scratch']
  %s0 = inlined_call_operand.hbm [shape: f32[1,16], index: 0, kind: input, shape index: {}]
  %s1 = inlined_call_operand.hbm [shape: f32[2,64], index: 1, kind: input, shape index: {}]
  %s2 = inlined_call_operand.hbm [shape: f32[2,80], index: 2, kind: output, shape index: {}]
  %s3 = sld [smem:[#allocation0]]
  $region26: #{tpu_custom_call.1} parent=0
    _
  %s5 = ssub.s32 1, %s3
  %s6 = scalar_select 0, %s5, %s3
  $region1: #{tpu_custom_call.1} parent=0
    #allocation2 [shape = 'u8[512]{0}', space=vmem, size = 0x400, scoped, tag = 'input window, operand 0, single buffered']
    #allocation3 [shape = 's32[1]{0}', space=sflag, size = 0x4, scoped, tag = 'scoped memory for tpu_custom_call.1']
    #allocation4 [shape = 's32[1]{0}', space=sflag, size = 0x4, scoped, tag = 'scoped memory for tpu_custom_call.1']
    #allocation5 [shape = 'u8[1024]{0}', space=vmem, size = 0x400, scoped, tag = 'input window, operand 1, single buffered']
    #allocation6 [shape = 's32[1]{0}', space=sflag, size = 0x4, scoped, tag = 'scoped memory for tpu_custom_call.1']
    #allocation7 [shape = 'u8[1024]{0}', space=vmem, size = 0x400, scoped, tag = 'output window, operand 0, single buffered']
    %7 = vsyncpa [#allocation3], 0
    %8 = vsyncpa [#allocation6], 0
    %9 = vsyncpa [#allocation4], 0
    // Predicated region
    $region2: #{tpu_custom_call.1} parent=1 // pred_check
      _
    $region3: #{tpu_custom_call.1} parent=1 // pred_check_branch
      %11 = sbr.rel (0) target = $region5
    $region4: #{tpu_custom_call.1} parent=1 // pred_region
      %s13 = ssub.s32 16, 16
      %14 = vsyncadd [#allocation3], %s13
      %s16 = sshll.u32 [#allocation2], 4
      %s17 = int_to_ptr.vmem [resolvable:$true] %s16
      %19 = dma.hbm_to_vmem [thread:$0]  %s0, 16, %s17, [#allocation3]
    $region5: #{tpu_custom_call.1} parent=1 // pred_fallthru
      _
    // Predicated region
    $region6: #{tpu_custom_call.1} parent=1 // pred_check
      _
    $region7: #{tpu_custom_call.1} parent=1 // pred_check_branch
      %21 = sbr.rel (0) target = $region9
    $region8: #{tpu_custom_call.1} parent=1 // pred_region
      %s23 = ssub.s32 32, 32
      %24 = vsyncadd [#allocation6], %s23
      %s26 = sshll.u32 [#allocation5], 4
      %s27 = int_to_ptr.vmem [resolvable:$true] %s26
      %29 = dma.hbm_to_vmem [thread:$0]  %s1, 32, %s27, [#allocation6]
    $region9: #{tpu_custom_call.1} parent=1 // pred_fallthru
      _
    // Predicated region
    $region10: #{tpu_custom_call.1} parent=1 // pred_check
      _
    $region11: #{tpu_custom_call.1} parent=1 // pred_check_branch
      %31 = sbr.rel (0) target = $region13
    $region12: #{tpu_custom_call.1} parent=1 // pred_region
      %32 = dma.done [#allocation3], 16
    $region13: #{tpu_custom_call.1} parent=1 // pred_fallthru
      _
    // Predicated region
    $region14: #{tpu_custom_call.1} parent=1 // pred_check
      _
    $region15: #{tpu_custom_call.1} parent=1 // pred_check_branch
      %34 = sbr.rel (0) target = $region17
    $region16: #{tpu_custom_call.1} parent=1 // pred_region
      %35 = dma.done [#allocation6], 32
    $region17: #{tpu_custom_call.1} parent=1 // pred_fallthru
      _
    %v36 = vld [vmem:[#allocation5] sm:$0x3]
    %vm37 = vcmask 517120
    %38 = vst.msk [vmem:[#allocation7] sm:$0x3] %vm37, %v36
    %v39 = vld [vmem:[#allocation2] sm:$0x1]
    %v41 = vlaneseq
    %v42 = vshrl.u32 %v41, 7
    %v43 = vsub.s32 0, %v42
    %v44 = vrot.slane %v39, %v43
    %45 = vrot.lane.b32.xlu0 %v44, 64
    %v46 = vpop.permute.xlu0 %45
    %vm48 = vcmask 648704
    %49 = vst.msk [vmem:[#allocation7] sm:$0x3] %vm48, %v46
    // Predicated region
    $region18: #{tpu_custom_call.1} parent=1 // pred_check
      _
    $region19: #{tpu_custom_call.1} parent=1 // pred_check_branch
      %51 = sbr.rel (0) target = $region21
    $region20: #{tpu_custom_call.1} parent=1 // pred_region
      %s53 = ssub.s32 32, 32
      %54 = vsyncadd [#allocation4], %s53
      %s56 = sshll.u32 [#allocation7], 4
      %s57 = int_to_ptr.vmem [resolvable:$true] %s56
      %59 = dma.vmem_to_hbm [thread:$0]  %s57, 32, %s2, [#allocation4]
    $region21: #{tpu_custom_call.1} parent=1 // pred_fallthru
      _
    // Predicated region
    $region22: #{tpu_custom_call.1} parent=1 // pred_check
      _
    $region23: #{tpu_custom_call.1} parent=1 // pred_check_branch
      %61 = sbr.rel (0) target = $region25
    $region24: #{tpu_custom_call.1} parent=1 // pred_region
      %62 = dma.done [#allocation4], 32
    $region25: #{tpu_custom_call.1} parent=1 // pred_fallthru
      _
    %63 = vsyncpa [#allocation3], 1
    %64 = vsyncpa [#allocation6], 1
    %65 = vsyncpa [#allocation4], 1

</llo_original>
